<compile_context>
chip_gen: v6e
topology: v6e:2x2x1
jax: 0.10.0
libtpu: 0.0.40
codegen_flags: <defaults>
</compile_context>

<pallas_src>
import numpy as np
import jax
import jax.numpy as jnp
from jax.experimental import pallas as pl
from jax.experimental.pallas import tpu as pltpu


# ----------------------------- Pallas kernel ------------------------------- #
def _task_kernel(x_ref, wband_ref, bc_ref, whb_ref, bh_ref, out_ref, xp_ref):
    """Per-image fused conv3x3 + bias + ReLU + global-avg-pool + task head.

    x_ref:     (H, W*Cin)         f32  one image, channels-last, (w,cin) merged
    wband_ref: (3, W*Cin, W*Cmid) bf16 banded conv weight (kw, cin and the
                                       zero-pad along W folded in), one per kh
    bc_ref:    (1, W*Cmid)        f32  conv bias tiled along w
    whb_ref:   (W*Cmid, Dout)     f32  head weight tiled along w, pre-scaled 1/HW
    bh_ref:    (1, Dout)          f32  head bias
    out_ref:   (1, Dout)          f32
    xp_ref:    (H+2, W*Cin)       f32  VMEM scratch: zero-padded input tile
    """
    H, WCin = x_ref.shape
    WCmid = wband_ref.shape[2]

    # Build the zero-padded input tile in VMEM (pad=1 along H; padding along W
    # is folded into the banded weights) -- no host-side pad / im2col slab.
    xp_ref[pl.ds(0, 1), :] = jnp.zeros((1, WCin), jnp.float32)
    xp_ref[pl.ds(H + 1, 1), :] = jnp.zeros((1, WCin), jnp.float32)
    xp_ref[pl.ds(1, H), :] = x_ref[...]

    # conv3x3 (pad=1, stride=1) as 3 lane-dense MXU matmuls (one per kh shift),
    # bf16 operands, f32 accumulation.  Output lanes = W*Cmid (multiple of 128).
    acc = jnp.zeros((H, WCmid), jnp.float32)
    for dy in range(3):                                    # static -> unrolled
        win = xp_ref[pl.ds(dy, H), :].astype(jnp.bfloat16)  # (H, W*Cin)
        acc = acc + jnp.dot(win, wband_ref[dy],
                            preferred_element_type=jnp.float32)

    # bias + ReLU in f32 on the VPU (v5e has no bf16 VALU; slab is ~8 vregs).
    act = jnp.maximum(acc + bc_ref[...], 0.0)              # (H, W*Cmid) f32

    # global average pool: f32 sublane reduce over H (XLU slot); the reduce
    # over W and the 1/HW scale are folded into the tiled head weight.
    hsum = jnp.sum(act, axis=0, keepdims=True)             # (1, W*Cmid) f32

    # task-head matmul + bias, single store.
    head = jnp.dot(hsum, whb_ref[...], preferred_element_type=jnp.float32)
    out_ref[...] = (head + bh_ref[...]).astype(out_ref.dtype)


# ------------------------------ host wrapper ------------------------------- #
def task_wrapper_forward(x_nchw, params, task):
    """Pallas equivalent of `_TaskWrapper(model, task)(x)` (selected head only)."""
    wc, bc = params["conv_w"], params["conv_b"]            # (9*Cin, Cmid), (Cmid,)
    wh, bh = params["heads"][task]                         # (Cmid, Dout), (Dout,)

    B, Cin, H, W = x_nchw.shape
    Cmid = wc.shape[1]
    Dout = wh.shape[1]
    HW = H * W

    # ---- host glue (layout only) ------------------------------------------
    # TODO(synk): the NCHW->NHWC transpose is layout glue imposed by the
    # PyTorch input convention; it remains a single host XLA op.
    x2 = jnp.transpose(x_nchw, (0, 2, 3, 1)).reshape(B, H, W * Cin)   # f32

    # ---- parameter preprocessing (weight-only; hoistable/cacheable) --------
    # Banded conv weight: fold kw taps, cin, and the zero-pad along W into a
    # (3, W*Cin, W*Cmid) matrix so the conv is 3 lane-dense matmuls per image.
    S = np.zeros((3, W, W), np.float32)                    # S[dx, wp, w]
    for dx in range(3):
        for w in range(W):
            wp = w + dx - 1
            if 0 <= wp < W:
                S[dx, wp, w] = 1.0
    wc4 = wc.reshape(3, 3, Cin, Cmid)                      # (kh, kw, cin, cmid)
    wband = jnp.einsum("dpw,kdio->kpiwo", jnp.asarray(S), wc4)
    wband = wband.reshape(3, W * Cin, W * Cmid).astype(jnp.bfloat16)

    bc_t = jnp.tile(bc, W).reshape(1, W * Cmid).astype(jnp.float32)
    whb = (jnp.tile(wh, (W, 1)) / HW).astype(jnp.float32)  # (W*Cmid, Dout)
    bh2 = bh.reshape(1, Dout).astype(jnp.float32)

    flops = B * (2 * 3 * H * (W * Cin) * (W * Cmid) + 2 * (W * Cmid) * Dout)
    bytes_accessed = (x2.size * 4 + wband.size * 2 + bc_t.size * 4
                      + whb.size * 4 + bh2.size * 4 + B * Dout * 4)

    out = pl.pallas_call(
        _task_kernel,
        out_shape=jax.ShapeDtypeStruct((B, 1, Dout), jnp.float32),
        grid=(B,),                                          # one image per step
        in_specs=[
            pl.BlockSpec((None, H, W * Cin), lambda b: (b, 0, 0)),        # x
            pl.BlockSpec((3, W * Cin, W * Cmid), lambda b: (0, 0, 0)),    # wband
            pl.BlockSpec((1, W * Cmid), lambda b: (0, 0)),                # bc
            pl.BlockSpec((W * Cmid, Dout), lambda b: (0, 0)),             # whb
            pl.BlockSpec((1, Dout), lambda b: (0, 0)),                    # bh
        ],
        out_specs=pl.BlockSpec((None, 1, Dout), lambda b: (b, 0, 0)),
        scratch_shapes=[pltpu.VMEM((H + 2, W * Cin), jnp.float32)],
        compiler_params=pltpu.CompilerParams(
            # batch axis is independent -> split across v7x's two TensorCores
            dimension_semantics=("parallel",)),
        cost_estimate=pl.CostEstimate(flops=flops, transcendentals=0,
                                      bytes_accessed=bytes_accessed),
    )(x2, wband, bc_t, whb, bh2)

    return out.reshape(B, Dout)


# --------------------------- pure-JAX reference ----------------------------- #
def _reference(x_nchw, params, task):
    wc, bc = params["conv_w"], params["conv_b"]
    wh, bh = params["heads"][task]
    B, Cin, H, W = x_nchw.shape
    x = jnp.transpose(x_nchw, (0, 2, 3, 1))
    xp = jnp.pad(x, ((0, 0), (1, 1), (1, 1), (0, 0)))
    shifts = [xp[:, dy:dy + H, dx:dx + W, :] for dy in range(3) for dx in range(3)]
    patches = jnp.stack(shifts, axis=3).reshape(B, H * W, 9 * Cin)
    act = jnp.maximum(patches @ wc + bc[None, None, :], 0.0)
    pooled = act.mean(axis=1)
    return pooled @ wh + bh[None, :]


# ----------------------------------- main ----------------------------------- #
if __name__ == "__main__":
    key = jax.random.PRNGKey(0)
    k_x, k_wc, k_bc, k_wh1, k_bh1, k_wh2, k_bh2 = jax.random.split(key, 7)

    B, Cin, H, W = 2, 4, 16, 16
    Cmid, Dout = 32, 16
    K = 9 * Cin

    # deterministic synthetic parameters (the wrapped module would own these)
    params = {
        "conv_w": 0.1 * jax.random.normal(k_wc, (K, Cmid), jnp.float32),
        "conv_b": 0.1 * jax.random.normal(k_bc, (Cmid,), jnp.float32),
        "heads": {
            "cls": (0.1 * jax.random.normal(k_wh1, (Cmid, Dout), jnp.float32),
                    0.1 * jax.random.normal(k_bh1, (Dout,), jnp.float32)),
            "seg": (0.1 * jax.random.normal(k_wh2, (Cmid, Dout), jnp.float32),
                    0.1 * jax.random.normal(k_bh2, (Dout,), jnp.float32)),
        },
    }

    x = jax.random.normal(k_x, (B, Cin, H, W), jnp.float32)   # NCHW, like PyTorch

    task = "cls"
    fwd = jax.jit(task_wrapper_forward, static_argnames="task")
    y = jax.block_until_ready(fwd(x, params, task=task))

    y_ref = _reference(x, params, task)
    # conv matmuls use bf16 MXU operands with f32 accumulation -> relaxed tol.
    np.testing.assert_allclose(np.asarray(y), np.asarray(y_ref),
                               rtol=2e-2, atol=2e-2)

    # TODO(synk): _TaskWrapper's functional_call / dict-indexing plumbing is
    # Python glue; only the selected task head's compute is lowered.
    print("KERNEL_OK")
</pallas_src>

<mosaic_0001>
module attributes {stable_mosaic.version = 11 : i64} {
  func.func @_task_kernel(%arg0: i32, %arg1: memref<1x16x64xf32, #tpu.memory_space<vmem>>, %arg2: memref<3x64x512xbf16, #tpu.memory_space<vmem>>, %arg3: memref<1x512xf32, #tpu.memory_space<vmem>>, %arg4: memref<512x16xf32, #tpu.memory_space<vmem>>, %arg5: memref<1x16xf32, #tpu.memory_space<vmem>>, %arg6: memref<1x1x16xf32, #tpu.memory_space<vmem>>, %arg7: memref<18x64xf32, #tpu.memory_space<vmem>>) attributes {dimension_semantics = [#tpu.dimension_semantics<parallel>], iteration_bounds = array<i64: 2>, scalar_prefetch = 0 : i64, scratch_operands = 1 : i64, tpu.core_type = #tpu.core_type<tc>, window_params = [{transform_indices = @transform_0, window_bounds = array<i64: 1, 16, 64>}, {pipeline_mode = #tpu.pipeline_mode<synchronous>, transform_indices = @transform_1, window_bounds = array<i64: 3, 64, 512>}, {pipeline_mode = #tpu.pipeline_mode<synchronous>, transform_indices = @transform_2, window_bounds = array<i64: 1, 512>}, {pipeline_mode = #tpu.pipeline_mode<synchronous>, transform_indices = @transform_3, window_bounds = array<i64: 512, 16>}, {pipeline_mode = #tpu.pipeline_mode<synchronous>, transform_indices = @transform_4, window_bounds = array<i64: 1, 16>}, {transform_indices = @transform_5, window_bounds = array<i64: 1, 1, 16>}]} {
    %cst = arith.constant 0.000000e+00 : f32
    %0 = vector.broadcast %cst : f32 to vector<1x64xf32>
    %c0 = arith.constant 0 : index
    %c0_0 = arith.constant 0 : index
    %1 = vector.load %arg7[%c0, %c0_0] : memref<18x64xf32, #tpu.memory_space<vmem>>, vector<1x64xf32>
    tpu.vector_store %arg7[%c0, %c0_0], %0 {strides = array<i32>} : memref<18x64xf32, #tpu.memory_space<vmem>>, vector<1x64xf32>,
    %cst_1 = arith.constant 0.000000e+00 : f32
    %2 = vector.broadcast %cst_1 : f32 to vector<1x64xf32>
    %c17 = arith.constant 17 : index
    %c0_2 = arith.constant 0 : index
    %3 = vector.load %arg7[%c17, %c0_2] : memref<18x64xf32, #tpu.memory_space<vmem>>, vector<1x64xf32>
    tpu.vector_store %arg7[%c17, %c0_2], %2 {strides = array<i32>} : memref<18x64xf32, #tpu.memory_space<vmem>>, vector<1x64xf32>,
    %c0_3 = arith.constant 0 : index
    %c0_4 = arith.constant 0 : index
    %c0_5 = arith.constant 0 : index
    %4 = vector.load %arg1[%c0_3, %c0_4, %c0_5] : memref<1x16x64xf32, #tpu.memory_space<vmem>>, vector<1x16x64xf32>
    %5 = vector.shape_cast %4 : vector<1x16x64xf32> to vector<16x64xf32>
    %c1 = arith.constant 1 : index
    %c0_6 = arith.constant 0 : index
    %6 = vector.load %arg7[%c1, %c0_6] : memref<18x64xf32, #tpu.memory_space<vmem>>, vector<16x64xf32>
    tpu.vector_store %arg7[%c1, %c0_6], %5 {strides = array<i32>} : memref<18x64xf32, #tpu.memory_space<vmem>>, vector<16x64xf32>,
    %cst_7 = arith.constant 0.000000e+00 : f32
    %7 = vector.broadcast %cst_7 : f32 to vector<16x512xf32>
    %c0_8 = arith.constant 0 : index
    %c0_9 = arith.constant 0 : index
    %8 = vector.load %arg7[%c0_8, %c0_9] : memref<18x64xf32, #tpu.memory_space<vmem>>, vector<16x64xf32>
    %9 = arith.truncf %8 : vector<16x64xf32> to vector<16x64xbf16>
    %c0_10 = arith.constant 0 : index
    %c0_11 = arith.constant 0 : index
    %c0_12 = arith.constant 0 : index
    %10 = vector.load %arg2[%c0_10, %c0_11, %c0_12] : memref<3x64x512xbf16, #tpu.memory_space<vmem>>, vector<1x64x512xbf16>
    %11 = vector.shape_cast %10 : vector<1x64x512xbf16> to vector<64x512xbf16>
    %cst_13 = arith.constant dense<0.000000e+00> : vector<16x512xf32>
    %12 = tpu.matmul %9, %11, %cst_13 {dimension_numbers = #tpu.dot_dimension_numbers<[1], [0], [0], [1], [0, 0, 1, 1], [], []>} : vector<16x64xbf16>, vector<64x512xbf16>, vector<16x512xf32> -> vector<16x512xf32>
    %13 = arith.addf %7, %12 : vector<16x512xf32>
    %c1_14 = arith.constant 1 : index
    %c0_15 = arith.constant 0 : index
    %14 = vector.load %arg7[%c1_14, %c0_15] : memref<18x64xf32, #tpu.memory_space<vmem>>, vector<16x64xf32>
    %15 = arith.truncf %14 : vector<16x64xf32> to vector<16x64xbf16>
    %c1_16 = arith.constant 1 : index
    %c0_17 = arith.constant 0 : index
    %c0_18 = arith.constant 0 : index
    %16 = vector.load %arg2[%c1_16, %c0_17, %c0_18] : memref<3x64x512xbf16, #tpu.memory_space<vmem>>, vector<1x64x512xbf16>
    %17 = vector.shape_cast %16 : vector<1x64x512xbf16> to vector<64x512xbf16>
    %cst_19 = arith.constant dense<0.000000e+00> : vector<16x512xf32>
    %18 = tpu.matmul %15, %17, %cst_19 {dimension_numbers = #tpu.dot_dimension_numbers<[1], [0], [0], [1], [0, 0, 1, 1], [], []>} : vector<16x64xbf16>, vector<64x512xbf16>, vector<16x512xf32> -> vector<16x512xf32>
    %19 = arith.addf %13, %18 : vector<16x512xf32>
    %c2 = arith.constant 2 : index
    %c0_20 = arith.constant 0 : index
    %20 = vector.load %arg7[%c2, %c0_20] : memref<18x64xf32, #tpu.memory_space<vmem>>, vector<16x64xf32>
    %21 = arith.truncf %20 : vector<16x64xf32> to vector<16x64xbf16>
    %c2_21 = arith.constant 2 : index
    %c0_22 = arith.constant 0 : index
    %c0_23 = arith.constant 0 : index
    %22 = vector.load %arg2[%c2_21, %c0_22, %c0_23] : memref<3x64x512xbf16, #tpu.memory_space<vmem>>, vector<1x64x512xbf16>
    %23 = vector.shape_cast %22 : vector<1x64x512xbf16> to vector<64x512xbf16>
    %cst_24 = arith.constant dense<0.000000e+00> : vector<16x512xf32>
    %24 = tpu.matmul %21, %23, %cst_24 {dimension_numbers = #tpu.dot_dimension_numbers<[1], [0], [0], [1], [0, 0, 1, 1], [], []>} : vector<16x64xbf16>, vector<64x512xbf16>, vector<16x512xf32> -> vector<16x512xf32>
    %25 = arith.addf %19, %24 : vector<16x512xf32>
    %c0_25 = arith.constant 0 : index
    %c0_26 = arith.constant 0 : index
    %26 = vector.load %arg3[%c0_25, %c0_26] : memref<1x512xf32, #tpu.memory_space<vmem>>, vector<1x512xf32>
    %27 = vector.broadcast %26 : vector<1x512xf32> to vector<16x512xf32>
    %28 = arith.addf %25, %27 : vector<16x512xf32>
    %cst_27 = arith.constant 0.000000e+00 : f32
    %29 = vector.broadcast %cst_27 : f32 to vector<16x512xf32>
    %30 = arith.maximumf %28, %29 : vector<16x512xf32>
    %cst_28 = arith.constant dense<0.000000e+00> : vector<512xf32>
    %31 = vector.multi_reduction <add>, %30, %cst_28 [0] : vector<16x512xf32> to vector<512xf32>
    %32 = vector.shape_cast %31 : vector<512xf32> to vector<1x512xf32>
    %c0_29 = arith.constant 0 : index
    %c0_30 = arith.constant 0 : index
    %33 = vector.load %arg4[%c0_29, %c0_30] : memref<512x16xf32, #tpu.memory_space<vmem>>, vector<512x16xf32>
    %cst_31 = arith.constant dense<0.000000e+00> : vector<1x16xf32>
    %34 = tpu.matmul %32, %33, %cst_31 {dimension_numbers = #tpu.dot_dimension_numbers<[1], [0], [0], [1], [0, 0, 1, 1], [], []>} : vector<1x512xf32>, vector<512x16xf32>, vector<1x16xf32> -> vector<1x16xf32>
    %c0_32 = arith.constant 0 : index
    %c0_33 = arith.constant 0 : index
    %35 = vector.load %arg5[%c0_32, %c0_33] : memref<1x16xf32, #tpu.memory_space<vmem>>, vector<1x16xf32>
    %36 = arith.addf %34, %35 : vector<1x16xf32>
    %c0_34 = arith.constant 0 : index
    %c0_35 = arith.constant 0 : index
    %c0_36 = arith.constant 0 : index
    %37 = vector.load %arg6[%c0_34, %c0_35, %c0_36] : memref<1x1x16xf32, #tpu.memory_space<vmem>>, vector<1x1x16xf32>
    %38 = vector.shape_cast %37 : vector<1x1x16xf32> to vector<1x16xf32>
    %39 = vector.shape_cast %36 : vector<1x16xf32> to vector<1x1x16xf32>
    tpu.vector_store %arg6[%c0_34, %c0_35, %c0_36], %39 {strides = array<i32>} : memref<1x1x16xf32, #tpu.memory_space<vmem>>, vector<1x1x16xf32>,
    return
  }
  func.func @transform_0(%arg0: i32) -> (i32, i32, i32) {
    %c0_i32 = arith.constant 0 : i32
    %c0_i32_0 = arith.constant 0 : i32
    %c0_i32_1 = arith.constant 0 : i32
    return %arg0, %c0_i32, %c0_i32_0 : i32, i32, i32
  }
  func.func @transform_1(%arg0: i32) -> (i32, i32, i32) {
    %c0_i32 = arith.constant 0 : i32
    %c0_i32_0 = arith.constant 0 : i32
    %c0_i32_1 = arith.constant 0 : i32
    %c0_i32_2 = arith.constant 0 : i32
    return %c0_i32, %c0_i32_0, %c0_i32_1 : i32, i32, i32
  }
  func.func @transform_2(%arg0: i32) -> (i32, i32) {
    %c0_i32 = arith.constant 0 : i32
    %c0_i32_0 = arith.constant 0 : i32
    %c0_i32_1 = arith.constant 0 : i32
    return %c0_i32, %c0_i32_0 : i32, i32
  }
  func.func @transform_3(%arg0: i32) -> (i32, i32) {
    %c0_i32 = arith.constant 0 : i32
    %c0_i32_0 = arith.constant 0 : i32
    %c0_i32_1 = arith.constant 0 : i32
    return %c0_i32, %c0_i32_0 : i32, i32
  }
  func.func @transform_4(%arg0: i32) -> (i32, i32) {
    %c0_i32 = arith.constant 0 : i32
    %c0_i32_0 = arith.constant 0 : i32
    %c0_i32_1 = arith.constant 0 : i32
    return %c0_i32, %c0_i32_0 : i32, i32
  }
  func.func @transform_5(%arg0: i32) -> (i32, i32, i32) {
    %c0_i32 = arith.constant 0 : i32
    %c0_i32_0 = arith.constant 0 : i32
    %c0_i32_1 = arith.constant 0 : i32
    return %arg0, %c0_i32, %c0_i32_0 : i32, i32, i32
  }
}

</mosaic_0001>

<llo_original>
// kernel: tile.13
$region0: #{tile.13}
  #allocation0 [shape = 's32[1]{0}', space=sflag, size = 0x4, scoped, tag = 'scoped memory for tile.13']
  %s0 = inlined_call_operand.vmem [shape: f32[32], index: 0, kind: input, shape index: {}]
  %s1 = inlined_call_operand.vmem [shape: f32[16,32], index: 1, kind: output, shape index: {}]
  // Predicated region
  $region2: #{tile.13} parent=0 // pred_check
    _
  $region3: #{tile.13} parent=0 // pred_check_branch
    %3 = sbr.rel (0) target = $region5
  $region4: #{tile.13} parent=0 // pred_region
    _
  $region5: #{tile.13} parent=0 // pred_fallthru
    _
  %v4 = vld [vmem:[%s0] ss:$0 sm:$0xff]
  %5 = vst [vmem:[%s1] sm:$0xff] %v4
  %s6 = scalar_lea.vmem %s1, 8
  %7 = vst [vmem:[%s6] sm:$0xff] %v4

// kernel: tile.14
$region0: #{tile.14}
  %s0 = inlined_call_operand.vmem [shape: f32[16,32], index: 0, kind: input, shape index: {}]
  %s1 = inlined_call_operand.vmem [shape: f32[1,512], index: 1, kind: output, shape index: {}]
  $region1: #{tile.14} parent=0
    #allocation0 [shape = 'u8[16384]{0}', space=vmem, size = 0x4000, scoped, tag = 'scoped mem for output reshape']
    %v2 = vld [vmem:[%s0] ss:$4 sm:$0xf]
    %vm3 = vcmask 261120
    %4 = vst.msk [vmem:[#allocation0] ss:$8 sm:$0xf] %vm3, %v2
    %s5 = scalar_lea.vmem %s0, 3
    %v6 = vld [vmem:[%s5] ss:$4 sm:$0xf]
    %7 = vrot.lane.b32.xlu0 %v6, 96
    %v8 = vpop.permute.xlu0 %7
    %vm9 = vcmask 1048320
    %10 = vst.msk [vmem:[#allocation0] ss:$8 sm:$0xf] %vm9, %v8
    %s11 = scalar_lea.vmem %s0, 2
    %v12 = vld [vmem:[%s11] ss:$4 sm:$0xf]
    %13 = vrot.lane.b32.xlu0 %v12, 64
    %v14 = vpop.permute.xlu0 %13
    %vm15 = vcmask 785920
    %16 = vst.msk [vmem:[#allocation0] ss:$8 sm:$0xf] %vm15, %v14
    %s17 = scalar_lea.vmem %s0, 1
    %v18 = vld [vmem:[%s17] ss:$4 sm:$0xf]
    %19 = vrot.lane.b32.xlu0 %v18, 32
    %v20 = vpop.permute.xlu0 %19
    %vm21 = vcmask 523520
    %22 = vst.msk [vmem:[#allocation0] ss:$8 sm:$0xf] %vm21, %v20
    %s24 = sshll.u32 1, 1
    %s25 = ssub.s32 %s24, 1
    %v27 = vld [vmem:[#allocation0] sm:%s25]
    %s28 = sshll.u32 1, 1
    %s29 = ssub.s32 %s28, 1
    %30 = vst [vmem:[%s1] sm:%s29] %v27
    %s31 = scalar_lea.vmem [#allocation0], 8
    %v32 = vld [vmem:[%s31] sm:%s25]
    %s33 = sshll.u32 1, 1
    %s34 = ssub.s32 %s33, 1
    %s35 = scalar_lea.vmem %s1, 1
    %36 = vst [vmem:[%s35] sm:%s34] %v32
    %s37 = scalar_lea.vmem [#allocation0], 16
    %v38 = vld [vmem:[%s37] sm:%s25]
    %s39 = sshll.u32 1, 1
    %s40 = ssub.s32 %s39, 1
    %s41 = smul.addr 1, 2
    %s42 = scalar_lea.vmem %s1, %s41
    %43 = vst [vmem:[%s42] sm:%s40] %v38
    %s44 = scalar_lea.vmem [#allocation0], 24
    %v45 = vld [vmem:[%s44] sm:%s25]
    %s46 = sshll.u32 1, 1
    %s47 = ssub.s32 %s46, 1
    %s48 = smul.addr 1, 3
    %s49 = scalar_lea.vmem %s1, %s48
    %50 = vst [vmem:[%s49] sm:%s47] %v45

// kernel: task_wrapper_forward.1
$region0: #{task_wrapper_forward.1}
  #allocation0 [shape = 'u32[]', space=smem, size = 0x4, offset = 0x4, fixed_abs, tag = 'smem constant byte address 0x4 - core index']
  #allocation1 [shape = 'u32[144,128]{1,0:T(1,128)}', space=vmem, size = 0x12000, scoped, tag = 'internal scratch']
  #allocation2 [shape = 'f32[18,64]{1,0:T(8,128)}', space=vmem, size = 0x3000, scoped, tag = 'scratch operand']
  %s0 = inlined_call_operand.vmem [shape: f32[2,16,64], index: 0, kind: input, shape index: {}]
  %s1 = inlined_call_operand.vmem [shape: bf16[3,64,512], index: 1, kind: input, shape index: {}]
  %s2 = inlined_call_operand.vmem [shape: f32[1,512], index: 2, kind: input, shape index: {}]
  %s3 = inlined_call_operand.vmem [shape: f32[512,16], index: 3, kind: input, shape index: {}]
  %s4 = inlined_call_operand.vmem [shape: f32[1,16], index: 4, kind: input, shape index: {}]
  %s5 = inlined_call_operand.hbm [shape: f32[2,1,16], index: 5, kind: output, shape index: {}]
  %s6 = sld [smem:[#allocation0]]
  $region53: #{task_wrapper_forward.1} parent=0
    _
  %s8 = ssub.s32 1, %s6
  %s9 = scalar_select 0, %s8, %s6
  $region1: #{task_wrapper_forward.1} parent=0
    #allocation3 [shape = 'u8[1024]{0}', space=vmem, size = 0x400, scoped, tag = 'output window, operand 0']
    #allocation4 [shape = 's32[2]{0}', space=sflag, size = 0x8, scoped, tag = 'scoped memory for task_wrapper_forward.1']
    %10 = vsyncpa [#allocation4], 0
    %s11 = scalar_lea.sflag [#allocation4], 1
    %12 = vsyncpa %s11, 0
    loop: start=0, step=1, limit=4
    $region2: #{task_wrapper_forward.1} parent=1 // loop_pre_header
      _
    $region3: #{task_wrapper_forward.1} parent=1 // loop_header
      %s14 = sphi 0, %s18
      %p15 = scmp.ge.s32.totalorder %s14, 4
      %s24 = sphi 0, %s26
      %s27 = sphi 0, %s24
      %s28 = sphi 0, %s27
      %s44 = sphi 0, %s28
      %s48 = sphi 0, %s48
      %s50 = sphi 0, %s48
      %s51 = sphi 0, %s50
      %s65 = sphi 0, %s51
      %s69 = sphi 0, %s69
      %s71 = sphi 0, %s69
      %s72 = sphi 0, %s71
      %s86 = sphi 0, %s72
      %s90 = sphi 0, %s90
      %s92 = sphi 0, %s90
      %s93 = sphi 0, %s92
      %s107 = sphi 0, %s93
      %s111 = sphi 0, %s111
      %s113 = sphi 0, %s111
      %s114 = sphi 0, %s113
      %s128 = sphi 0, %s114
      %s134 = sphi 0, %s136
      %s137 = sphi 0, %s134
      %s138 = sphi 0, %s137
      %s154 = sphi 0, %s138
    $region4: #{task_wrapper_forward.1} parent=1 // loop_header_branch
      %17 = sbr.rel (%p15) target = $region8
    $region5: #{task_wrapper_forward.1} parent=1 // loop_body
      %s19 = ssub.s32 %s14, 1
      %s20 = ssub.s32 %s14, 2
      %s21 = sadd.s32 %s14, 1
      %s22 = ssub.s32 %s14, %s21
      %p23 = scmp.eq.s32.totalorder %s22, 0
      %s25 = sadd.s32 %s24, 1
      %s26 = scalar_select %p23, %s24, %s25
      %p29 = pneg %p23
      %p30 = scmp.eq.s32.totalorder %s14, 1
      %p31 = por %p29, %p30
      %p32 = scmp.ne.s32.totalorder %s24, %s27
      %p33 = scmp.eq.s32.totalorder %s14, 0
      %p34 = por %p32, %p33
      %p35 = scmp.ne.s32.totalorder %s24, %s27
      %p36 = scmp.eq.s32.totalorder %s19, 1
      %p37 = por %p35, %p36
      %p38 = scmp.ne.s32.totalorder %s27, %s28
      %p39 = scmp.eq.s32.totalorder %s19, 0
      %p40 = por %p38, %p39
      %p41 = scmp.ne.s32.totalorder %s27, %s28
      %p42 = scmp.eq.s32.totalorder %s20, 1
      %p43 = por %p41, %p42
      %p45 = scmp.ne.s32.totalorder %s28, %s44
      %p46 = scmp.eq.s32.totalorder %s20, 0
      %p47 = por %p45, %p46
      %s49 = sadd.s32 %s48, 1
      %p52 = scmp.eq.s32.totalorder %s14, 1
      %p53 = scmp.ne.s32.totalorder %s48, %s50
      %p54 = scmp.eq.s32.totalorder %s14, 0
      %p55 = por %p53, %p54
      %p56 = scmp.ne.s32.totalorder %s48, %s50
      %p57 = scmp.eq.s32.totalorder %s19, 1
      %p58 = por %p56, %p57
      %p59 = scmp.ne.s32.totalorder %s50, %s51
      %p60 = scmp.eq.s32.totalorder %s19, 0
      %p61 = por %p59, %p60
      %p62 = scmp.ne.s32.totalorder %s50, %s51
      %p63 = scmp.eq.s32.totalorder %s20, 1
      %p64 = por %p62, %p63
      %p66 = scmp.ne.s32.totalorder %s51, %s65
      %p67 = scmp.eq.s32.totalorder %s20, 0
      %p68 = por %p66, %p67
      %s70 = sadd.s32 %s69, 1
      %p73 = scmp.eq.s32.totalorder %s14, 1
      %p74 = scmp.ne.s32.totalorder %s69, %s71
      %p75 = scmp.eq.s32.totalorder %s14, 0
      %p76 = por %p74, %p75
      %p77 = scmp.ne.s32.totalorder %s69, %s71
      %p78 = scmp.eq.s32.totalorder %s19, 1
      %p79 = por %p77, %p78
      %p80 = scmp.ne.s32.totalorder %s71, %s72
      %p81 = scmp.eq.s32.totalorder %s19, 0
      %p82 = por %p80, %p81
      %p83 = scmp.ne.s32.totalorder %s71, %s72
      %p84 = scmp.eq.s32.totalorder %s20, 1
      %p85 = por %p83, %p84
      %p87 = scmp.ne.s32.totalorder %s72, %s86
      %p88 = scmp.eq.s32.totalorder %s20, 0
      %p89 = por %p87, %p88
      %s91 = sadd.s32 %s90, 1
      %p94 = scmp.eq.s32.totalorder %s14, 1
      %p95 = scmp.ne.s32.totalorder %s90, %s92
      %p96 = scmp.eq.s32.totalorder %s14, 0
      %p97 = por %p95, %p96
      %p98 = scmp.ne.s32.totalorder %s90, %s92
      %p99 = scmp.eq.s32.totalorder %s19, 1
      %p100 = por %p98, %p99
      %p101 = scmp.ne.s32.totalorder %s92, %s93
      %p102 = scmp.eq.s32.totalorder %s19, 0
      %p103 = por %p101, %p102
      %p104 = scmp.ne.s32.totalorder %s92, %s93
      %p105 = scmp.eq.s32.totalorder %s20, 1
      %p106 = por %p104, %p105
      %p108 = scmp.ne.s32.totalorder %s93, %s107
      %p109 = scmp.eq.s32.totalorder %s20, 0
      %p110 = por %p108, %p109
      %s112 = sadd.s32 %s111, 1
      %p115 = scmp.eq.s32.totalorder %s14, 1
      %p116 = scmp.ne.s32.totalorder %s111, %s113
      %p117 = scmp.eq.s32.totalorder %s14, 0
      %p118 = por %p116, %p117
      %p119 = scmp.ne.s32.totalorder %s111, %s113
      %p120 = scmp.eq.s32.totalorder %s19, 1
      %p121 = por %p119, %p120
      %p122 = scmp.ne.s32.totalorder %s113, %s114
      %p123 = scmp.eq.s32.totalorder %s19, 0
      %p124 = por %p122, %p123
      %p125 = scmp.ne.s32.totalorder %s113, %s114
      %p126 = scmp.eq.s32.totalorder %s20, 1
      %p127 = por %p125, %p126
      %p129 = scmp.ne.s32.totalorder %s114, %s128
      %p130 = scmp.eq.s32.totalorder %s20, 0
      %p131 = por %p129, %p130
      %s132 = ssub.s32 %s14, %s21
      %p133 = scmp.eq.s32.totalorder %s132, 0
      %s135 = sadd.s32 %s134, 1
      %s136 = scalar_select %p133, %s134, %s135
      %p139 = pneg %p133
      %p140 = scmp.eq.s32.totalorder %s14, 1
      %p141 = por %p139, %p140
      %p142 = scmp.ne.s32.totalorder %s134, %s137
      %p143 = scmp.eq.s32.totalorder %s14, 0
      %p144 = por %p142, %p143
      %p145 = scmp.ne.s32.totalorder %s134, %s137
      %p146 = scmp.eq.s32.totalorder %s19, 1
      %p147 = por %p145, %p146
      %p148 = scmp.ne.s32.totalorder %s137, %s138
      %p149 = scmp.eq.s32.totalorder %s19, 0
      %p150 = por %p148, %p149
      %p151 = scmp.ne.s32.totalorder %s137, %s138
      %p152 = scmp.eq.s32.totalorder %s20, 1
      %p153 = por %p151, %p152
      %p155 = scmp.ne.s32.totalorder %s138, %s154
      %p156 = scmp.eq.s32.totalorder %s20, 0
      %p157 = por %p155, %p156
      %p158 = scmp.le.s32.totalorder 1, %s14
      %p159 = scmp.lt.s32.totalorder %s14, 3
      %p160 = pnand %p158, %p159
      %p161 = pneg %p160
      // Predicated region
      $region9: #{task_wrapper_forward.1} parent=5 // pred_check
        _
      $region10: #{task_wrapper_forward.1} parent=5 // pred_check_branch
        %163 = sbr.rel (%p160) target = $region12
      $region11: #{task_wrapper_forward.1} parent=5 // pred_region
        %s164 = ssub.s32 %s14, 1
        // Predicated region
        $region13: #{task_wrapper_forward.1} parent=11 // pred_check
          %p165 = pneg %p61
        $region14: #{task_wrapper_forward.1} parent=11 // pred_check_branch
          %167 = sbr.rel (%p165) target = $region16
        $region15: #{task_wrapper_forward.1} parent=11 // pred_region
          _
        $region16: #{task_wrapper_forward.1} parent=11 // pred_fallthru
          _
        // Predicated region
        $region17: #{task_wrapper_forward.1} parent=11 // pred_check
          %p168 = pneg %p82
        $region18: #{task_wrapper_forward.1} parent=11 // pred_check_branch
          %170 = sbr.rel (%p168) target = $region20
        $region19: #{task_wrapper_forward.1} parent=11 // pred_region
          _
        $region20: #{task_wrapper_forward.1} parent=11 // pred_fallthru
          _
        // Predicated region
        $region21: #{task_wrapper_forward.1} parent=11 // pred_check
          %p171 = pneg %p103
        $region22: #{task_wrapper_forward.1} parent=11 // pred_check_branch
          %173 = sbr.rel (%p171) target = $region24
        $region23: #{task_wrapper_forward.1} parent=11 // pred_region
          _
        $region24: #{task_wrapper_forward.1} parent=11 // pred_fallthru
          _
        // Predicated region
        $region25: #{task_wrapper_forward.1} parent=11 // pred_check
          %p174 = pneg %p124
        $region26: #{task_wrapper_forward.1} parent=11 // pred_check_branch
          %176 = sbr.rel (%p174) target = $region28
        $region27: #{task_wrapper_forward.1} parent=11 // pred_region
          _
        $region28: #{task_wrapper_forward.1} parent=11 // pred_fallthru
          _
      $region12: #{task_wrapper_forward.1} parent=5 // pred_fallthru
        _
      %p177 = scmp.lt.s32.totalorder %s14, 2
      // Predicated region
      $region29: #{task_wrapper_forward.1} parent=5 // pred_check
        %p178 = pneg %p177
      $region30: #{task_wrapper_forward.1} parent=5 // pred_check_branch
        %180 = sbr.rel (%p178) target = $region32
      $region31: #{task_wrapper_forward.1} parent=5 // pred_region
        // Predicated region
        $region33: #{task_wrapper_forward.1} parent=31 // pred_check
          %p181 = pneg %p34
        $region34: #{task_wrapper_forward.1} parent=31 // pred_check_branch
          %183 = sbr.rel (%p181) target = $region36
        $region35: #{task_wrapper_forward.1} parent=31 // pred_region
          %p184 = scmp.lt.s32.totalorder %s14, 1
          %s185 = scalar_select %p184, %s14, 1
          %s186 = smul.addr %s185, 2
          %s187 = smul.addr %s186, 8
          %s188 = scalar_lea.vmem %s0, %s187
        $region36: #{task_wrapper_forward.1} parent=31 // pred_fallthru
          _
      $region32: #{task_wrapper_forward.1} parent=5 // pred_fallthru
        _
      %p189 = scmp.le.s32.totalorder 1, %s14
      %p190 = scmp.lt.s32.totalorder %s14, 3
      %p191 = pnand %p189, %p190
      %p192 = pneg %p191
      // Predicated region
      $region37: #{task_wrapper_forward.1} parent=5 // pred_check
        _
      $region38: #{task_wrapper_forward.1} parent=5 // pred_check_branch
        %194 = sbr.rel (%p191) target = $region40
      $region39: #{task_wrapper_forward.1} parent=5 // pred_region
        %s195 = ssub.s32 %s14, 1
        %p196 = scmp.lt.s32.totalorder %s19, 1
        %s197 = scalar_select %p196, %s19, 1
        %s198 = smul.addr %s197, 2
        %s199 = smul.addr %s198, 8
        %s200 = scalar_lea.vmem %s0, %s199
        %p201 = pneg %p40
        %p202 = pneg %p37
        %p203 = pneg %p61
        %p204 = pneg %p58
        %p205 = pneg %p82
        %p206 = pneg %p79
        %p207 = pneg %p103
        %p208 = pneg %p100
        %p209 = pneg %p124
        %p210 = pneg %p121
        %p211 = pneg %p150
        %p212 = pneg %p147
        %s213 = sand.u32 %s137, 1
        %s214 = scalar_lea.sflag [#allocation4], %s213
        %s215 = sand.u32 %s137, 1
        %s216 = scalar_lea.vmem [#allocation3], %s215
        %p217 = scmp.lt.s32.totalorder %s19, 1
        %s218 = scalar_select %p217, %s19, 1
        %s219 = smul.addr %s218, 2
        %s220 = smul.addr %s219, 8
        %s221 = scalar_lea.vmem %s0, %s220
        %vm223 = vcmask 516096
        %224 = vst.msk [vmem:[#allocation2] sm:$0x1] %vm223, 0.0
        %225 = vst.msk [vmem:[#allocation2 + $0x11] sm:$0x1] %vm223, 0.0
        %v226 = vld [vmem:[%s221] sm:$0xff]
        %v227 = vld [vmem:[%s221 + $0x8] sm:$0xff]
        %vm228 = vcmask 523264
        %229 = vst.msk [vmem:[#allocation2 + $0x1] sm:$0xff] %vm228, %v226
        %230 = vst.msk [vmem:[#allocation2 + $0x9] sm:$0xff] %vm228, %v227
        %v231 = vld [vmem:[#allocation2] sm:$0xff]
        %v232 = vld [vmem:[#allocation2 + $0x8] sm:$0xff]
        %v233 = vpack.c.bf16 %v232, %v231
        %v234 = vld [vmem:[%s1] sm:$0xff]
        %v235 = vld [vmem:[%s1 + $0x8] sm:$0xff]
        %v236 = vld [vmem:[%s1 + $0x10] sm:$0xff]
        %v237 = vld [vmem:[%s1 + $0x18] sm:$0xff]
        %v238 = vld [vmem:[%s1 + $0x20] sm:$0xff]
        %v239 = vld [vmem:[%s1 + $0x28] sm:$0xff]
        %v240 = vld [vmem:[%s1 + $0x30] sm:$0xff]
        %v241 = vld [vmem:[%s1 + $0x38] sm:$0xff]
        %v242 = vld [vmem:[%s1 + $0x40] sm:$0xff]
        %v243 = vld [vmem:[%s1 + $0x48] sm:$0xff]
        %v244 = vld [vmem:[%s1 + $0x50] sm:$0xff]
        %v245 = vld [vmem:[%s1 + $0x58] sm:$0xff]
        %v246 = vld [vmem:[%s1 + $0x60] sm:$0xff]
        %v247 = vld [vmem:[%s1 + $0x68] sm:$0xff]
        %v248 = vld [vmem:[%s1 + $0x70] sm:$0xff]
        %v249 = vld [vmem:[%s1 + $0x78] sm:$0xff]
        %v250 = vld [vmem:[#allocation2 + $0x1] sm:$0xff]
        %v251 = vld [vmem:[#allocation2 + $0x9] sm:$0xff]
        %v252 = vpack.c.bf16 %v251, %v250
        %s253 = scalar_lea.vmem %s1, 128
        %v254 = vld [vmem:[%s253] sm:$0xff]
        %v255 = vld [vmem:[%s253 + $0x8] sm:$0xff]
        %v256 = vld [vmem:[%s253 + $0x10] sm:$0xff]
        %v257 = vld [vmem:[%s253 + $0x18] sm:$0xff]
        %v258 = vld [vmem:[%s253 + $0x20] sm:$0xff]
        %v259 = vld [vmem:[%s253 + $0x28] sm:$0xff]
        %v260 = vld [vmem:[%s253 + $0x30] sm:$0xff]
        %v261 = vld [vmem:[%s253 + $0x38] sm:$0xff]
        %v262 = vld [vmem:[%s253 + $0x40] sm:$0xff]
        %v263 = vld [vmem:[%s253 + $0x48] sm:$0xff]
        %v264 = vld [vmem:[%s253 + $0x50] sm:$0xff]
        %v265 = vld [vmem:[%s253 + $0x58] sm:$0xff]
        %v266 = vld [vmem:[%s253 + $0x60] sm:$0xff]
        %v267 = vld [vmem:[%s253 + $0x68] sm:$0xff]
        %v268 = vld [vmem:[%s253 + $0x70] sm:$0xff]
        %v269 = vld [vmem:[%s253 + $0x78] sm:$0xff]
        %v286 = vunpack.c.l.b16 %v254
        %v287 = vunpack.c.h.b16 %v254
        %v288 = vunpack.c.l.b16 %v255
        %v289 = vunpack.c.h.b16 %v255
        %v290 = vunpack.c.l.b16 %v256
        %v291 = vunpack.c.h.b16 %v256
        %v292 = vunpack.c.l.b16 %v257
        %v293 = vunpack.c.h.b16 %v257
        %v294 = vunpack.c.l.b16 %v258
        %v295 = vunpack.c.h.b16 %v258
        %v296 = vunpack.c.l.b16 %v259
        %v297 = vunpack.c.h.b16 %v259
        %v298 = vunpack.c.l.b16 %v260
        %v299 = vunpack.c.h.b16 %v260
        %v300 = vunpack.c.l.b16 %v261
        %v301 = vunpack.c.h.b16 %v261
        %v302 = vunpack.c.l.b16 %v262
        %v303 = vunpack.c.h.b16 %v262
        %v304 = vunpack.c.l.b16 %v263
        %v305 = vunpack.c.h.b16 %v263
        %v306 = vunpack.c.l.b16 %v264
        %v307 = vunpack.c.h.b16 %v264
        %v308 = vunpack.c.l.b16 %v265
        %v309 = vunpack.c.h.b16 %v265
        %v310 = vunpack.c.l.b16 %v266
        %v311 = vunpack.c.h.b16 %v266
        %v312 = vunpack.c.l.b16 %v267
        %v313 = vunpack.c.h.b16 %v267
        %v314 = vunpack.c.l.b16 %v268
        %v315 = vunpack.c.h.b16 %v268
        %v316 = vunpack.c.l.b16 %v269
        %v317 = vunpack.c.h.b16 %v269
        %v318 = vpack.c.b16 %v290, %v286
        %v319 = vpack.c.b16 %v291, %v287
        %v320 = vpack.c.b16 %v292, %v288
        %v321 = vpack.c.b16 %v293, %v289
        %v322 = vpack.c.b16 %v298, %v294
        %v323 = vpack.c.b16 %v299, %v295
        %v324 = vpack.c.b16 %v300, %v296
        %v325 = vpack.c.b16 %v301, %v297
        %v326 = vpack.c.b16 %v306, %v302
        %v327 = vpack.c.b16 %v307, %v303
        %v328 = vpack.c.b16 %v308, %v304
        %v329 = vpack.c.b16 %v309, %v305
        %v330 = vpack.c.b16 %v314, %v310
        %v331 = vpack.c.b16 %v315, %v311
        %v332 = vpack.c.b16 %v316, %v312
        %v333 = vpack.c.b16 %v317, %v313
        %v351 = vsel %vm228, %v252, 0
        %353 = vmatprep.subr.bf16.mxu0 0
        %354 = vmatpush1.bf16.msra.mxu0 0
        %355 = vmatprep.subr.bf16.mxu0 0
        %356 = vmatpush1.bf16.msra.mxu0 0
        %357 = vmatprep.subr.bf16.mxu0 0
        %358 = vmatpush1.bf16.msra.mxu0 0
        %359 = vmatprep.subr.bf16.mxu0 0
        %360 = vmatpush1.bf16.msra.mxu0 0
        %361 = vmatprep.subr.bf16.mxu0 %v331
        %362 = vmatpush1.bf16.msra.mxu0 %v330
        %363 = vmatprep.subr.bf16.mxu0 %v327
        %364 = vmatpush1.bf16.msra.mxu0 %v326
        %365 = vmatprep.subr.bf16.mxu0 %v323
        %366 = vmatpush1.bf16.msra.mxu0 %v322
        %367 = vmatprep.subr.bf16.mxu0 %v319
        %368 = vmatpush1.bf16.msra.mxu0 %v318
        %369 = vmatprep.subr.bf16.mxu0 0
        %370 = vmatpush2.bf16.msra.mxu0 0
        %371 = vmatprep.subr.bf16.mxu0 0
        %372 = vmatpush2.bf16.msra.mxu0 0
        %373 = vmatprep.subr.bf16.mxu0 0
        %374 = vmatpush2.bf16.msra.mxu0 0
        %375 = vmatprep.subr.bf16.mxu0 0
        %376 = vmatpush2.bf16.msra.mxu0 0
        %377 = vmatprep.subr.bf16.mxu0 0
        %378 = vmatpush2.bf16.msra.mxu0 0
        %379 = vmatprep.subr.bf16.mxu0 0
        %380 = vmatpush2.bf16.msra.mxu0 0
        %381 = vmatprep.subr.bf16.mxu0 0
        %382 = vmatpush2.bf16.msra.mxu0 0
        %383 = vmatprep.subr.bf16.mxu0 0
        %384 = vmatpush2.bf16.msra.mxu0 0
        %385 = vmatprep.mubr.bf16.mxu0 0
        %386 = vmatmul.mubr.bf16.gmra.mxu0 %v351
        %v387 = vpop.f32.mrf.mxu0
        %v388 = vadd.f32 0.0, %v387
        %v389 = vpop.f32.mrf.mxu0
        %v390 = vadd.f32 0.0, %v389
        %v391 = vpop.f32.mrf.mxu0
        %v392 = vadd.f32 0.0, %v391
        %v393 = vpop.f32.mrf.mxu0
        %v394 = vadd.f32 0.0, %v393
        %395 = vdwg.mxu0
        %396 = vmatprep.subr.bf16.mxu0 0
        %397 = vmatpush1.bf16.msra.mxu0 0
        %398 = vmatprep.subr.bf16.mxu0 0
        %399 = vmatpush1.bf16.msra.mxu0 0
        %400 = vmatprep.subr.bf16.mxu0 0
        %401 = vmatpush1.bf16.msra.mxu0 0
        %402 = vmatprep.subr.bf16.mxu0 0
        %403 = vmatpush1.bf16.msra.mxu0 0
        %404 = vmatprep.subr.bf16.mxu0 %v333
        %405 = vmatpush1.bf16.msra.mxu0 %v332
        %406 = vmatprep.subr.bf16.mxu0 %v329
        %407 = vmatpush1.bf16.msra.mxu0 %v328
        %408 = vmatprep.subr.bf16.mxu0 %v325
        %409 = vmatpush1.bf16.msra.mxu0 %v324
        %410 = vmatprep.subr.bf16.mxu0 %v321
        %411 = vmatpush1.bf16.msra.mxu0 %v320
        %412 = vmatprep.subr.bf16.mxu0 0
        %413 = vmatpush2.bf16.msra.mxu0 0
        %414 = vmatprep.subr.bf16.mxu0 0
        %415 = vmatpush2.bf16.msra.mxu0 0
        %416 = vmatprep.subr.bf16.mxu0 0
        %417 = vmatpush2.bf16.msra.mxu0 0
        %418 = vmatprep.subr.bf16.mxu0 0
        %419 = vmatpush2.bf16.msra.mxu0 0
        %420 = vmatprep.subr.bf16.mxu0 0
        %421 = vmatpush2.bf16.msra.mxu0 0
        %422 = vmatprep.subr.bf16.mxu0 0
        %423 = vmatpush2.bf16.msra.mxu0 0
        %424 = vmatprep.subr.bf16.mxu0 0
        %425 = vmatpush2.bf16.msra.mxu0 0
        %426 = vmatprep.subr.bf16.mxu0 0
        %427 = vmatpush2.bf16.msra.mxu0 0
        %428 = vmatprep.mubr.bf16.mxu0 0
        %429 = vmatmul.mubr.bf16.gmra.mxu0 %v351
        %v430 = vpop.f32.mrf.mxu0
        %v431 = vadd.f32 0.0, %v430
        %v432 = vpop.f32.mrf.mxu0
        %v433 = vadd.f32 0.0, %v432
        %v434 = vpop.f32.mrf.mxu0
        %v435 = vadd.f32 0.0, %v434
        %v436 = vpop.f32.mrf.mxu0
        %v437 = vadd.f32 0.0, %v436
        %438 = vdwg.mxu0
        %v455 = vunpack.c.l.b16 %v234
        %v456 = vunpack.c.h.b16 %v234
        %v457 = vunpack.c.l.b16 %v235
        %v458 = vunpack.c.h.b16 %v235
        %v459 = vunpack.c.l.b16 %v236
        %v460 = vunpack.c.h.b16 %v236
        %v461 = vunpack.c.l.b16 %v237
        %v462 = vunpack.c.h.b16 %v237
        %v463 = vunpack.c.l.b16 %v238
        %v464 = vunpack.c.h.b16 %v238
        %v465 = vunpack.c.l.b16 %v239
        %v466 = vunpack.c.h.b16 %v239
        %v467 = vunpack.c.l.b16 %v240
        %v468 = vunpack.c.h.b16 %v240
        %v469 = vunpack.c.l.b16 %v241
        %v470 = vunpack.c.h.b16 %v241
        %v471 = vunpack.c.l.b16 %v242
        %v472 = vunpack.c.h.b16 %v242
        %v473 = vunpack.c.l.b16 %v243
        %v474 = vunpack.c.h.b16 %v243
        %v475 = vunpack.c.l.b16 %v244
        %v476 = vunpack.c.h.b16 %v244
        %v477 = vunpack.c.l.b16 %v245
        %v478 = vunpack.c.h.b16 %v245
        %v479 = vunpack.c.l.b16 %v246
        %v480 = vunpack.c.h.b16 %v246
        %v481 = vunpack.c.l.b16 %v247
        %v482 = vunpack.c.h.b16 %v247
        %v483 = vunpack.c.l.b16 %v248
        %v484 = vunpack.c.h.b16 %v248
        %v485 = vunpack.c.l.b16 %v249
        %v486 = vunpack.c.h.b16 %v249
        %v487 = vpack.c.b16 %v459, %v455
        %v488 = vpack.c.b16 %v460, %v456
        %v489 = vpack.c.b16 %v461, %v457
        %v490 = vpack.c.b16 %v462, %v458
        %v491 = vpack.c.b16 %v467, %v463
        %v492 = vpack.c.b16 %v468, %v464
        %v493 = vpack.c.b16 %v469, %v465
        %v494 = vpack.c.b16 %v470, %v466
        %v495 = vpack.c.b16 %v475, %v471
        %v496 = vpack.c.b16 %v476, %v472
        %v497 = vpack.c.b16 %v477, %v473
        %v498 = vpack.c.b16 %v478, %v474
        %v499 = vpack.c.b16 %v483, %v479
        %v500 = vpack.c.b16 %v484, %v480
        %v501 = vpack.c.b16 %v485, %v481
        %v502 = vpack.c.b16 %v486, %v482
        %v520 = vsel %vm228, %v233, 0
        %522 = vmatprep.subr.bf16.mxu0 0
        %523 = vmatpush1.bf16.msra.mxu0 0
        %524 = vmatprep.subr.bf16.mxu0 0
        %525 = vmatpush1.bf16.msra.mxu0 0
        %526 = vmatprep.subr.bf16.mxu0 0
        %527 = vmatpush1.bf16.msra.mxu0 0
        %528 = vmatprep.subr.bf16.mxu0 0
        %529 = vmatpush1.bf16.msra.mxu0 0
        %530 = vmatprep.subr.bf16.mxu0 %v500
        %531 = vmatpush1.bf16.msra.mxu0 %v499
        %532 = vmatprep.subr.bf16.mxu0 %v496
        %533 = vmatpush1.bf16.msra.mxu0 %v495
        %534 = vmatprep.subr.bf16.mxu0 %v492
        %535 = vmatpush1.bf16.msra.mxu0 %v491
        %536 = vmatprep.subr.bf16.mxu0 %v488
        %537 = vmatpush1.bf16.msra.mxu0 %v487
        %538 = vmatprep.subr.bf16.mxu0 0
        %539 = vmatpush2.bf16.msra.mxu0 0
        %540 = vmatprep.subr.bf16.mxu0 0
        %541 = vmatpush2.bf16.msra.mxu0 0
        %542 = vmatprep.subr.bf16.mxu0 0
        %543 = vmatpush2.bf16.msra.mxu0 0
        %544 = vmatprep.subr.bf16.mxu0 0
        %545 = vmatpush2.bf16.msra.mxu0 0
        %546 = vmatprep.subr.bf16.mxu0 0
        %547 = vmatpush2.bf16.msra.mxu0 0
        %548 = vmatprep.subr.bf16.mxu0 0
        %549 = vmatpush2.bf16.msra.mxu0 0
        %550 = vmatprep.subr.bf16.mxu0 0
        %551 = vmatpush2.bf16.msra.mxu0 0
        %552 = vmatprep.subr.bf16.mxu0 0
        %553 = vmatpush2.bf16.msra.mxu0 0
        %554 = vmatprep.mubr.bf16.mxu0 0
        %555 = vmatmul.mubr.bf16.gmra.mxu0 %v520
        %v556 = vpop.f32.mrf.mxu0
        %v557 = vadd.f32 %v388, %v556
        %v558 = vpop.f32.mrf.mxu0
        %v559 = vadd.f32 %v390, %v558
        %v560 = vpop.f32.mrf.mxu0
        %v561 = vadd.f32 %v392, %v560
        %v562 = vpop.f32.mrf.mxu0
        %v563 = vadd.f32 %v394, %v562
        %564 = vdwg.mxu0
        %565 = vmatprep.subr.bf16.mxu0 0
        %566 = vmatpush1.bf16.msra.mxu0 0
        %567 = vmatprep.subr.bf16.mxu0 0
        %568 = vmatpush1.bf16.msra.mxu0 0
        %569 = vmatprep.subr.bf16.mxu0 0
        %570 = vmatpush1.bf16.msra.mxu0 0
        %571 = vmatprep.subr.bf16.mxu0 0
        %572 = vmatpush1.bf16.msra.mxu0 0
        %573 = vmatprep.subr.bf16.mxu0 %v502
        %574 = vmatpush1.bf16.msra.mxu0 %v501
        %575 = vmatprep.subr.bf16.mxu0 %v498
        %576 = vmatpush1.bf16.msra.mxu0 %v497
        %577 = vmatprep.subr.bf16.mxu0 %v494
        %578 = vmatpush1.bf16.msra.mxu0 %v493
        %579 = vmatprep.subr.bf16.mxu0 %v490
        %580 = vmatpush1.bf16.msra.mxu0 %v489
        %581 = vmatprep.subr.bf16.mxu0 0
        %582 = vmatpush2.bf16.msra.mxu0 0
        %583 = vmatprep.subr.bf16.mxu0 0
        %584 = vmatpush2.bf16.msra.mxu0 0
        %585 = vmatprep.subr.bf16.mxu0 0
        %586 = vmatpush2.bf16.msra.mxu0 0
        %587 = vmatprep.subr.bf16.mxu0 0
        %588 = vmatpush2.bf16.msra.mxu0 0
        %589 = vmatprep.subr.bf16.mxu0 0
        %590 = vmatpush2.bf16.msra.mxu0 0
        %591 = vmatprep.subr.bf16.mxu0 0
        %592 = vmatpush2.bf16.msra.mxu0 0
        %593 = vmatprep.subr.bf16.mxu0 0
        %594 = vmatpush2.bf16.msra.mxu0 0
        %595 = vmatprep.subr.bf16.mxu0 0
        %596 = vmatpush2.bf16.msra.mxu0 0
        %597 = vmatprep.mubr.bf16.mxu0 0
        %598 = vmatmul.mubr.bf16.gmra.mxu0 %v520
        %v599 = vpop.f32.mrf.mxu0
        %v600 = vadd.f32 %v431, %v599
        %v601 = vpop.f32.mrf.mxu0
        %v602 = vadd.f32 %v433, %v601
        %v603 = vpop.f32.mrf.mxu0
        %v604 = vadd.f32 %v435, %v603
        %v605 = vpop.f32.mrf.mxu0
        %v606 = vadd.f32 %v437, %v605
        %607 = vdwg.mxu0
        %v608 = vld [vmem:[#allocation2 + $0x2] sm:$0xff]
        %v609 = vld [vmem:[#allocation2 + $0xa] sm:$0xff]
        %v610 = vpack.c.bf16 %v609, %v608
        %s611 = scalar_lea.vmem %s1, 256
        %v612 = vld [vmem:[%s611] sm:$0xff]
        %v613 = vld [vmem:[%s611 + $0x8] sm:$0xff]
        %v614 = vld [vmem:[%s611 + $0x10] sm:$0xff]
        %v615 = vld [vmem:[%s611 + $0x18] sm:$0xff]
        %v616 = vld [vmem:[%s611 + $0x20] sm:$0xff]
        %v617 = vld [vmem:[%s611 + $0x28] sm:$0xff]
        %v618 = vld [vmem:[%s611 + $0x30] sm:$0xff]
        %v619 = vld [vmem:[%s611 + $0x38] sm:$0xff]
        %v620 = vld [vmem:[%s611 + $0x40] sm:$0xff]
        %v621 = vld [vmem:[%s611 + $0x48] sm:$0xff]
        %v622 = vld [vmem:[%s611 + $0x50] sm:$0xff]
        %v623 = vld [vmem:[%s611 + $0x58] sm:$0xff]
        %v624 = vld [vmem:[%s611 + $0x60] sm:$0xff]
        %v625 = vld [vmem:[%s611 + $0x68] sm:$0xff]
        %v626 = vld [vmem:[%s611 + $0x70] sm:$0xff]
        %v627 = vld [vmem:[%s611 + $0x78] sm:$0xff]
        %v644 = vunpack.c.l.b16 %v612
        %v645 = vunpack.c.h.b16 %v612
        %v646 = vunpack.c.l.b16 %v613
        %v647 = vunpack.c.h.b16 %v613
        %v648 = vunpack.c.l.b16 %v614
        %v649 = vunpack.c.h.b16 %v614
        %v650 = vunpack.c.l.b16 %v615
        %v651 = vunpack.c.h.b16 %v615
        %v652 = vunpack.c.l.b16 %v616
        %v653 = vunpack.c.h.b16 %v616
        %v654 = vunpack.c.l.b16 %v617
        %v655 = vunpack.c.h.b16 %v617
        %v656 = vunpack.c.l.b16 %v618
        %v657 = vunpack.c.h.b16 %v618
        %v658 = vunpack.c.l.b16 %v619
        %v659 = vunpack.c.h.b16 %v619
        %v660 = vunpack.c.l.b16 %v620
        %v661 = vunpack.c.h.b16 %v620
        %v662 = vunpack.c.l.b16 %v621
        %v663 = vunpack.c.h.b16 %v621
        %v664 = vunpack.c.l.b16 %v622
        %v665 = vunpack.c.h.b16 %v622
        %v666 = vunpack.c.l.b16 %v623
        %v667 = vunpack.c.h.b16 %v623
        %v668 = vunpack.c.l.b16 %v624
        %v669 = vunpack.c.h.b16 %v624
        %v670 = vunpack.c.l.b16 %v625
        %v671 = vunpack.c.h.b16 %v625
        %v672 = vunpack.c.l.b16 %v626
        %v673 = vunpack.c.h.b16 %v626
        %v674 = vunpack.c.l.b16 %v627
        %v675 = vunpack.c.h.b16 %v627
        %v676 = vpack.c.b16 %v648, %v644
        %v677 = vpack.c.b16 %v649, %v645
        %v678 = vpack.c.b16 %v650, %v646
        %v679 = vpack.c.b16 %v651, %v647
        %v680 = vpack.c.b16 %v656, %v652
        %v681 = vpack.c.b16 %v657, %v653
        %v682 = vpack.c.b16 %v658, %v654
        %v683 = vpack.c.b16 %v659, %v655
        %v684 = vpack.c.b16 %v664, %v660
        %v685 = vpack.c.b16 %v665, %v661
        %v686 = vpack.c.b16 %v666, %v662
        %v687 = vpack.c.b16 %v667, %v663
        %v688 = vpack.c.b16 %v672, %v668
        %v689 = vpack.c.b16 %v673, %v669
        %v690 = vpack.c.b16 %v674, %v670
        %v691 = vpack.c.b16 %v675, %v671
        %v709 = vsel %vm228, %v610, 0
        %711 = vmatprep.subr.bf16.mxu0 0
        %712 = vmatpush1.bf16.msra.mxu0 0
        %713 = vmatprep.subr.bf16.mxu0 0
        %714 = vmatpush1.bf16.msra.mxu0 0
        %715 = vmatprep.subr.bf16.mxu0 0
        %716 = vmatpush1.bf16.msra.mxu0 0
        %717 = vmatprep.subr.bf16.mxu0 0
        %718 = vmatpush1.bf16.msra.mxu0 0
        %719 = vmatprep.subr.bf16.mxu0 %v689
        %720 = vmatpush1.bf16.msra.mxu0 %v688
        %721 = vmatprep.subr.bf16.mxu0 %v685
        %722 = vmatpush1.bf16.msra.mxu0 %v684
        %723 = vmatprep.subr.bf16.mxu0 %v681
        %724 = vmatpush1.bf16.msra.mxu0 %v680
        %725 = vmatprep.subr.bf16.mxu0 %v677
        %726 = vmatpush1.bf16.msra.mxu0 %v676
        %727 = vmatprep.subr.bf16.mxu0 0
        %728 = vmatpush2.bf16.msra.mxu0 0
        %729 = vmatprep.subr.bf16.mxu0 0
        %730 = vmatpush2.bf16.msra.mxu0 0
        %731 = vmatprep.subr.bf16.mxu0 0
        %732 = vmatpush2.bf16.msra.mxu0 0
        %733 = vmatprep.subr.bf16.mxu0 0
        %734 = vmatpush2.bf16.msra.mxu0 0
        %735 = vmatprep.subr.bf16.mxu0 0
        %736 = vmatpush2.bf16.msra.mxu0 0
        %737 = vmatprep.subr.bf16.mxu0 0
        %738 = vmatpush2.bf16.msra.mxu0 0
        %739 = vmatprep.subr.bf16.mxu0 0
        %740 = vmatpush2.bf16.msra.mxu0 0
        %741 = vmatprep.subr.bf16.mxu0 0
        %742 = vmatpush2.bf16.msra.mxu0 0
        %743 = vmatprep.mubr.bf16.mxu0 0
        %744 = vmatmul.mubr.bf16.gmra.mxu0 %v709
        %v745 = vpop.f32.mrf.mxu0
        %v746 = vadd.f32 0.0, %v745
        %v747 = vpop.f32.mrf.mxu0
        %v748 = vadd.f32 0.0, %v747
        %v749 = vpop.f32.mrf.mxu0
        %v750 = vadd.f32 0.0, %v749
        %v751 = vpop.f32.mrf.mxu0
        %v752 = vadd.f32 0.0, %v751
        %753 = vdwg.mxu0
        %754 = vmatprep.subr.bf16.mxu0 0
        %755 = vmatpush1.bf16.msra.mxu0 0
        %756 = vmatprep.subr.bf16.mxu0 0
        %757 = vmatpush1.bf16.msra.mxu0 0
        %758 = vmatprep.subr.bf16.mxu0 0
        %759 = vmatpush1.bf16.msra.mxu0 0
        %760 = vmatprep.subr.bf16.mxu0 0
        %761 = vmatpush1.bf16.msra.mxu0 0
        %762 = vmatprep.subr.bf16.mxu0 %v691
        %763 = vmatpush1.bf16.msra.mxu0 %v690
        %764 = vmatprep.subr.bf16.mxu0 %v687
        %765 = vmatpush1.bf16.msra.mxu0 %v686
        %766 = vmatprep.subr.bf16.mxu0 %v683
        %767 = vmatpush1.bf16.msra.mxu0 %v682
        %768 = vmatprep.subr.bf16.mxu0 %v679
        %769 = vmatpush1.bf16.msra.mxu0 %v678
        %770 = vmatprep.subr.bf16.mxu0 0
        %771 = vmatpush2.bf16.msra.mxu0 0
        %772 = vmatprep.subr.bf16.mxu0 0
        %773 = vmatpush2.bf16.msra.mxu0 0
        %774 = vmatprep.subr.bf16.mxu0 0
        %775 = vmatpush2.bf16.msra.mxu0 0
        %776 = vmatprep.subr.bf16.mxu0 0
        %777 = vmatpush2.bf16.msra.mxu0 0
        %778 = vmatprep.subr.bf16.mxu0 0
        %779 = vmatpush2.bf16.msra.mxu0 0
        %780 = vmatprep.subr.bf16.mxu0 0
        %781 = vmatpush2.bf16.msra.mxu0 0
        %782 = vmatprep.subr.bf16.mxu0 0
        %783 = vmatpush2.bf16.msra.mxu0 0
        %784 = vmatprep.subr.bf16.mxu0 0
        %785 = vmatpush2.bf16.msra.mxu0 0
        %786 = vmatprep.mubr.bf16.mxu0 0
        %787 = vmatmul.mubr.bf16.gmra.mxu0 %v709
        %v788 = vpop.f32.mrf.mxu0
        %v789 = vadd.f32 0.0, %v788
        %v790 = vpop.f32.mrf.mxu0
        %v791 = vadd.f32 0.0, %v790
        %v792 = vpop.f32.mrf.mxu0
        %v793 = vadd.f32 0.0, %v792
        %v794 = vpop.f32.mrf.mxu0
        %v795 = vadd.f32 0.0, %v794
        %796 = vdwg.mxu0
        %v797 = vadd.f32 %v557, %v746
        %v798 = vadd.f32 %v559, %v748
        %v799 = vadd.f32 %v600, %v789
        %v800 = vadd.f32 %v602, %v791
        %v801 = vadd.f32 %v561, %v750
        %v802 = vadd.f32 %v563, %v752
        %v803 = vadd.f32 %v604, %v793
        %v804 = vadd.f32 %v606, %v795
        %v805 = vld [vmem:[%s2] sm:$0xf]
        %v807 = vlaneseq
        %v808 = vshrl.u32 %v807, 7
        %v809 = vsub.s32 0, %v808
        %v810 = vrot.slane %v805, %v809
        %v811 = vlaneseq
        %v812 = vshrl.u32 %v811, 7
        %v813 = vsub.s32 1, %v812
        %v814 = vrot.slane %v805, %v813
        %v815 = vlaneseq
        %v816 = vshrl.u32 %v815, 7
        %v817 = vsub.s32 2, %v816
        %v818 = vrot.slane %v805, %v817
        %v819 = vlaneseq
        %v820 = vshrl.u32 %v819, 7
        %v821 = vsub.s32 3, %v820
        %v822 = vrot.slane %v805, %v821
        %v827 = vadd.f32 %v797, %v810
        %v828 = vadd.f32 %v798, %v814
        %v829 = vadd.f32 %v799, %v818
        %v830 = vadd.f32 %v800, %v822
        %v831 = vadd.f32 %v801, %v810
        %v832 = vadd.f32 %v802, %v814
        %v833 = vadd.f32 %v803, %v818
        %v834 = vadd.f32 %v804, %v822
        %v835 = vmax.f32 %v827, 0.0
        %v836 = vmax.f32 %v828, 0.0
        %v837 = vmax.f32 %v829, 0.0
        %v838 = vmax.f32 %v830, 0.0
        %v839 = vmax.f32 %v831, 0.0
        %v840 = vmax.f32 %v832, 0.0
        %v841 = vmax.f32 %v833, 0.0
        %v842 = vmax.f32 %v834, 0.0
        %v843 = vadd.f32 %v835, %v839
        %v844 = vrot.slane %v843, 4
        %v845 = vadd.f32 %v843, %v844
        %v846 = vrot.slane %v845, 2
        %v847 = vadd.f32 %v845, %v846
        %v848 = vrot.slane %v847, 1
        %v849 = vadd.f32 %v847, %v848
        %v850 = vadd.f32 %v836, %v840
        %v851 = vrot.slane %v850, 4
        %v852 = vadd.f32 %v850, %v851
        %v853 = vrot.slane %v852, 2
        %v854 = vadd.f32 %v852, %v853
        %v855 = vrot.slane %v854, 1
        %v856 = vadd.f32 %v854, %v855
        %v857 = vadd.f32 %v837, %v841
        %v858 = vrot.slane %v857, 4
        %v859 = vadd.f32 %v857, %v858
        %v860 = vrot.slane %v859, 2
        %v861 = vadd.f32 %v859, %v860
        %v862 = vrot.slane %v861, 1
        %v863 = vadd.f32 %v861, %v862
        %v864 = vadd.f32 %v838, %v842
        %v865 = vrot.slane %v864, 4
        %v866 = vadd.f32 %v864, %v865
        %v867 = vrot.slane %v866, 2
        %v868 = vadd.f32 %v866, %v867
        %v869 = vrot.slane %v868, 1
        %v870 = vadd.f32 %v868, %v869
        %v871 = vld [vmem:[%s3] sm:$0xff]
        %v872 = vld [vmem:[%s3 + $0x8] sm:$0xff]
        %v873 = vld [vmem:[%s3 + $0x10] sm:$0xff]
        %v874 = vld [vmem:[%s3 + $0x18] sm:$0xff]
        %v875 = vld [vmem:[%s3 + $0x20] sm:$0xff]
        %v876 = vld [vmem:[%s3 + $0x28] sm:$0xff]
        %v877 = vld [vmem:[%s3 + $0x30] sm:$0xff]
        %v878 = vld [vmem:[%s3 + $0x38] sm:$0xff]
        %v879 = vld [vmem:[%s3 + $0x40] sm:$0xff]
        %v880 = vld [vmem:[%s3 + $0x48] sm:$0xff]
        %v881 = vld [vmem:[%s3 + $0x50] sm:$0xff]
        %v882 = vld [vmem:[%s3 + $0x58] sm:$0xff]
        %v883 = vld [vmem:[%s3 + $0x60] sm:$0xff]
        %v884 = vld [vmem:[%s3 + $0x68] sm:$0xff]
        %v885 = vld [vmem:[%s3 + $0x70] sm:$0xff]
        %v886 = vld [vmem:[%s3 + $0x78] sm:$0xff]
        %v887 = vld [vmem:[%s3 + $0x80] sm:$0xff]
        %v888 = vld [vmem:[%s3 + $0x88] sm:$0xff]
        %v889 = vld [vmem:[%s3 + $0x90] sm:$0xff]
        %v890 = vld [vmem:[%s3 + $0x98] sm:$0xff]
        %v891 = vld [vmem:[%s3 + $0xa0] sm:$0xff]
        %v892 = vld [vmem:[%s3 + $0xa8] sm:$0xff]
        %v893 = vld [vmem:[%s3 + $0xb0] sm:$0xff]
        %v894 = vld [vmem:[%s3 + $0xb8] sm:$0xff]
        %v895 = vld [vmem:[%s3 + $0xc0] sm:$0xff]
        %v896 = vld [vmem:[%s3 + $0xc8] sm:$0xff]
        %v897 = vld [vmem:[%s3 + $0xd0] sm:$0xff]
        %v898 = vld [vmem:[%s3 + $0xd8] sm:$0xff]
        %v899 = vld [vmem:[%s3 + $0xe0] sm:$0xff]
        %v900 = vld [vmem:[%s3 + $0xe8] sm:$0xff]
        %v901 = vld [vmem:[%s3 + $0xf0] sm:$0xff]
        %v902 = vld [vmem:[%s3 + $0xf8] sm:$0xff]
        %v903 = vld [vmem:[%s3 + $0x100] sm:$0xff]
        %v904 = vld [vmem:[%s3 + $0x108] sm:$0xff]
        %v905 = vld [vmem:[%s3 + $0x110] sm:$0xff]
        %v906 = vld [vmem:[%s3 + $0x118] sm:$0xff]
        %v907 = vld [vmem:[%s3 + $0x120] sm:$0xff]
        %v908 = vld [vmem:[%s3 + $0x128] sm:$0xff]
        %v909 = vld [vmem:[%s3 + $0x130] sm:$0xff]
        %v910 = vld [vmem:[%s3 + $0x138] sm:$0xff]
        %v911 = vld [vmem:[%s3 + $0x140] sm:$0xff]
        %v912 = vld [vmem:[%s3 + $0x148] sm:$0xff]
        %v913 = vld [vmem:[%s3 + $0x150] sm:$0xff]
        %v914 = vld [vmem:[%s3 + $0x158] sm:$0xff]
        %v915 = vld [vmem:[%s3 + $0x160] sm:$0xff]
        %v916 = vld [vmem:[%s3 + $0x168] sm:$0xff]
        %v917 = vld [vmem:[%s3 + $0x170] sm:$0xff]
        %v918 = vld [vmem:[%s3 + $0x178] sm:$0xff]
        %v919 = vld [vmem:[%s3 + $0x180] sm:$0xff]
        %v920 = vld [vmem:[%s3 + $0x188] sm:$0xff]
        %v921 = vld [vmem:[%s3 + $0x190] sm:$0xff]
        %v922 = vld [vmem:[%s3 + $0x198] sm:$0xff]
        %v923 = vld [vmem:[%s3 + $0x1a0] sm:$0xff]
        %v924 = vld [vmem:[%s3 + $0x1a8] sm:$0xff]
        %v925 = vld [vmem:[%s3 + $0x1b0] sm:$0xff]
        %v926 = vld [vmem:[%s3 + $0x1b8] sm:$0xff]
        %v927 = vld [vmem:[%s3 + $0x1c0] sm:$0xff]
        %v928 = vld [vmem:[%s3 + $0x1c8] sm:$0xff]
        %v929 = vld [vmem:[%s3 + $0x1d0] sm:$0xff]
        %v930 = vld [vmem:[%s3 + $0x1d8] sm:$0xff]
        %v931 = vld [vmem:[%s3 + $0x1e0] sm:$0xff]
        %v932 = vld [vmem:[%s3 + $0x1e8] sm:$0xff]
        %v933 = vld [vmem:[%s3 + $0x1f0] sm:$0xff]
        %v934 = vld [vmem:[%s3 + $0x1f8] sm:$0xff]
        %v935 = vld [vmem:[%s4] sm:$0x1]
        %936 = vmatprep.subr.mxu0 0.0
        %937 = vmatpush1.msra.mxu0 %v886
        %938 = vmatprep.subr.mxu0 0.0
        %939 = vmatpush1.msra.mxu0 %v885
        %940 = vmatprep.subr.mxu0 0.0
        %941 = vmatpush1.msra.mxu0 %v884
        %942 = vmatprep.subr.mxu0 0.0
        %943 = vmatpush1.msra.mxu0 %v883
        %944 = vmatprep.subr.mxu0 0.0
        %945 = vmatpush1.msra.mxu0 %v882
        %946 = vmatprep.subr.mxu0 0.0
        %947 = vmatpush1.msra.mxu0 %v881
        %948 = vmatprep.subr.mxu0 0.0
        %949 = vmatpush1.msra.mxu0 %v880
        %950 = vmatprep.subr.mxu0 0.0
        %951 = vmatpush1.msra.mxu0 %v879
        %952 = vmatprep.subr.mxu0 0.0
        %953 = vmatpush1.msra.mxu0 %v878
        %954 = vmatprep.subr.mxu0 0.0
        %955 = vmatpush1.msra.mxu0 %v877
        %956 = vmatprep.subr.mxu0 0.0
        %957 = vmatpush1.msra.mxu0 %v876
        %958 = vmatprep.subr.mxu0 0.0
        %959 = vmatpush1.msra.mxu0 %v875
        %960 = vmatprep.subr.mxu0 0.0
        %961 = vmatpush1.msra.mxu0 %v874
        %962 = vmatprep.subr.mxu0 0.0
        %963 = vmatpush1.msra.mxu0 %v873
        %964 = vmatprep.subr.mxu0 0.0
        %965 = vmatpush1.msra.mxu0 %v872
        %966 = vmatprep.subr.mxu0 0.0
        %967 = vmatpush1.msra.mxu0 %v871
        %968 = vmatprep.subr.mxu0 0.0
        %969 = vmatpush2.msra.mxu0 %v902
        %970 = vmatprep.subr.mxu0 0.0
        %971 = vmatpush2.msra.mxu0 %v901
        %972 = vmatprep.subr.mxu0 0.0
        %973 = vmatpush2.msra.mxu0 %v900
        %974 = vmatprep.subr.mxu0 0.0
        %975 = vmatpush2.msra.mxu0 %v899
        %976 = vmatprep.subr.mxu0 0.0
        %977 = vmatpush2.msra.mxu0 %v898
        %978 = vmatprep.subr.mxu0 0.0
        %979 = vmatpush2.msra.mxu0 %v897
        %980 = vmatprep.subr.mxu0 0.0
        %981 = vmatpush2.msra.mxu0 %v896
        %982 = vmatprep.subr.mxu0 0.0
        %983 = vmatpush2.msra.mxu0 %v895
        %984 = vmatprep.subr.mxu0 0.0
        %985 = vmatpush2.msra.mxu0 %v894
        %986 = vmatprep.subr.mxu0 0.0
        %987 = vmatpush2.msra.mxu0 %v893
        %988 = vmatprep.subr.mxu0 0.0
        %989 = vmatpush2.msra.mxu0 %v892
        %990 = vmatprep.subr.mxu0 0.0
        %991 = vmatpush2.msra.mxu0 %v891
        %992 = vmatprep.subr.mxu0 0.0
        %993 = vmatpush2.msra.mxu0 %v890
        %994 = vmatprep.subr.mxu0 0.0
        %995 = vmatpush2.msra.mxu0 %v889
        %996 = vmatprep.subr.mxu0 0.0
        %997 = vmatpush2.msra.mxu0 %v888
        %998 = vmatprep.subr.mxu0 0.0
        %999 = vmatpush2.msra.mxu0 %v887
        %1000 = vmatprep.mubr.f32.mxu0 %v856
        %1001 = vmatmul.mubr.f32.gmra.mxu0 %v849
        %v1002 = vpop.f32.mrf.mxu0
        %v1003 = vadd.f32 %v935, %v1002
        %v1004 = vpop.f32.mrf.mxu0
        %1005 = vdwg.mxu0
        %1006 = vmatprep.subr.mxu0 0.0
        %1007 = vmatpush1.msra.mxu0 %v918
        %1008 = vmatprep.subr.mxu0 0.0
        %1009 = vmatpush1.msra.mxu0 %v917
        %1010 = vmatprep.subr.mxu0 0.0
        %1011 = vmatpush1.msra.mxu0 %v916
        %1012 = vmatprep.subr.mxu0 0.0
        %1013 = vmatpush1.msra.mxu0 %v915
        %1014 = vmatprep.subr.mxu0 0.0
        %1015 = vmatpush1.msra.mxu0 %v914
        %1016 = vmatprep.subr.mxu0 0.0
        %1017 = vmatpush1.msra.mxu0 %v913
        %1018 = vmatprep.subr.mxu0 0.0
        %1019 = vmatpush1.msra.mxu0 %v912
        %1020 = vmatprep.subr.mxu0 0.0
        %1021 = vmatpush1.msra.mxu0 %v911
        %1022 = vmatprep.subr.mxu0 0.0
        %1023 = vmatpush1.msra.mxu0 %v910
        %1024 = vmatprep.subr.mxu0 0.0
        %1025 = vmatpush1.msra.mxu0 %v909
        %1026 = vmatprep.subr.mxu0 0.0
        %1027 = vmatpush1.msra.mxu0 %v908
        %1028 = vmatprep.subr.mxu0 0.0
        %1029 = vmatpush1.msra.mxu0 %v907
        %1030 = vmatprep.subr.mxu0 0.0
        %1031 = vmatpush1.msra.mxu0 %v906
        %1032 = vmatprep.subr.mxu0 0.0
        %1033 = vmatpush1.msra.mxu0 %v905
        %1034 = vmatprep.subr.mxu0 0.0
        %1035 = vmatpush1.msra.mxu0 %v904
        %1036 = vmatprep.subr.mxu0 0.0
        %1037 = vmatpush1.msra.mxu0 %v903
        %1038 = vmatprep.subr.mxu0 0.0
        %1039 = vmatpush2.msra.mxu0 %v934
        %1040 = vmatprep.subr.mxu0 0.0
        %1041 = vmatpush2.msra.mxu0 %v933
        %1042 = vmatprep.subr.mxu0 0.0
        %1043 = vmatpush2.msra.mxu0 %v932
        %1044 = vmatprep.subr.mxu0 0.0
        %1045 = vmatpush2.msra.mxu0 %v931
        %1046 = vmatprep.subr.mxu0 0.0
        %1047 = vmatpush2.msra.mxu0 %v930
        %1048 = vmatprep.subr.mxu0 0.0
        %1049 = vmatpush2.msra.mxu0 %v929
        %1050 = vmatprep.subr.mxu0 0.0
        %1051 = vmatpush2.msra.mxu0 %v928
        %1052 = vmatprep.subr.mxu0 0.0
        %1053 = vmatpush2.msra.mxu0 %v927
        %1054 = vmatprep.subr.mxu0 0.0
        %1055 = vmatpush2.msra.mxu0 %v926
        %1056 = vmatprep.subr.mxu0 0.0
        %1057 = vmatpush2.msra.mxu0 %v925
        %1058 = vmatprep.subr.mxu0 0.0
        %1059 = vmatpush2.msra.mxu0 %v924
        %1060 = vmatprep.subr.mxu0 0.0
        %1061 = vmatpush2.msra.mxu0 %v923
        %1062 = vmatprep.subr.mxu0 0.0
        %1063 = vmatpush2.msra.mxu0 %v922
        %1064 = vmatprep.subr.mxu0 0.0
        %1065 = vmatpush2.msra.mxu0 %v921
        %1066 = vmatprep.subr.mxu0 0.0
        %1067 = vmatpush2.msra.mxu0 %v920
        %1068 = vmatprep.subr.mxu0 0.0
        %1069 = vmatpush2.msra.mxu0 %v919
        %1070 = vmatprep.mubr.f32.mxu0 %v870
        %1071 = vmatmul.mubr.f32.gmra.mxu0 %v863
        %v1072 = vpop.f32.mrf.mxu0
        %v1073 = vadd.f32 %v1003, %v1072
        %v1074 = vpop.f32.mrf.mxu0
        %1075 = vdwg.mxu0
        %vm1076 = vcmask 122880
        %1077 = vst.msk [vmem:[%s216] sm:$0x1] %vm1076, %v1073
        %s1078 = sand.u32 %s137, 1
        %s1079 = scalar_lea.sflag [#allocation4], %s1078
        %s1080 = sand.u32 %s137, 1
        %s1081 = scalar_lea.vmem [#allocation3], %s1080
        // Predicated region
        $region41: #{task_wrapper_forward.1} parent=39 // pred_check
          %p1082 = pneg %p147
        $region42: #{task_wrapper_forward.1} parent=39 // pred_check_branch
          %1084 = sbr.rel (%p1082) target = $region44
        $region43: #{task_wrapper_forward.1} parent=39 // pred_region
          %s1086 = ssub.s32 16, 16
          %1087 = vsyncadd %s1079, %s1086
          %s1088 = smul.addr %s19, 16
          %s1089 = scalar_lea.hbm %s5, %s1088
          %s1091 = sshll.u32 %s1081, 4
          %s1092 = int_to_ptr.vmem [resolvable:$true] %s1091
          %1094 = dma.vmem_to_hbm [thread:$0]  %s1092, 16, %s1089, %s1079
        $region44: #{task_wrapper_forward.1} parent=39 // pred_fallthru
          _
      $region40: #{task_wrapper_forward.1} parent=5 // pred_fallthru
        _
      %p1095 = scmp.le.s32.totalorder 2, %s14
      // Predicated region
      $region45: #{task_wrapper_forward.1} parent=5 // pred_check
        %p1096 = pneg %p1095
      $region46: #{task_wrapper_forward.1} parent=5 // pred_check_branch
        %1098 = sbr.rel (%p1096) target = $region48
      $region47: #{task_wrapper_forward.1} parent=5 // pred_region
        %s1099 = ssub.s32 %s14, 2
        // Predicated region
        $region49: #{task_wrapper_forward.1} parent=47 // pred_check
          %p1100 = pneg %p153
        $region50: #{task_wrapper_forward.1} parent=47 // pred_check_branch
          %1102 = sbr.rel (%p1100) target = $region52
        $region51: #{task_wrapper_forward.1} parent=47 // pred_region
          %s1103 = sand.u32 %s138, 1
          %s1104 = scalar_lea.sflag [#allocation4], %s1103
          %s1105 = sand.u32 %s138, 1
          %s1106 = scalar_lea.vmem [#allocation3], %s1105
          %1107 = dma.done %s1104, 16
        $region52: #{task_wrapper_forward.1} parent=47 // pred_fallthru
          _
      $region48: #{task_wrapper_forward.1} parent=5 // pred_fallthru
        _
    $region6: #{task_wrapper_forward.1} parent=1 // loop_footer
      %s18 = sadd.s32 1, %s14
    $region7: #{task_wrapper_forward.1} parent=1 // loop_footer_branch
      %13 = sbr.rel target = $region3
    $region8: #{task_wrapper_forward.1} parent=1 // loop_exit
      _
    %1108 = vsyncpa [#allocation4], 1
    %s1109 = scalar_lea.sflag [#allocation4], 1
    %1110 = vsyncpa %s1109, 1

</llo_original>
